<compile_context>
chip_gen: v7x
topology: tpu7x:2x2x1
jax: 0.10.0
libtpu: 0.0.40
codegen_flags: <defaults>
</compile_context>

<pallas_src>
import jax
import jax.numpy as jnp
from jax.experimental import pallas as pl
from jax.experimental.pallas import tpu as pltpu


# ----------------------------------------------------------------------------
# Primary path: aliased, zero-HBM-traffic identity.
# ----------------------------------------------------------------------------
def _touch_identity_kernel(x_ref, o_ref):
    # Output aliases input -> data is already in place.  Only pin the
    # dependency so the (side-effecting) call is kept and ordered correctly.
    pltpu.touch(x_ref)
    pltpu.touch(o_ref)


def _alias_noop_identity(x: jax.Array) -> jax.Array:
    return pl.pallas_call(
        _touch_identity_kernel,
        out_shape=jax.ShapeDtypeStruct(x.shape, x.dtype),
        in_specs=[pl.BlockSpec(memory_space=pl.ANY)],   # raw HBM ref, no auto-DMA
        out_specs=pl.BlockSpec(memory_space=pl.ANY),    # raw HBM ref, no auto-DMA
        input_output_aliases={0: 0},                    # output IS the input buffer
        compiler_params=pltpu.CompilerParams(has_side_effects=True),
    )(x)


# ----------------------------------------------------------------------------
# Fallback path: tiled streaming copy (only used if the no-copy path fails).
# ----------------------------------------------------------------------------
def _copy_kernel(x_ref, o_ref):
    # Full-tile load + full-lane unmasked store.
    o_ref[...] = x_ref[...]


def _vmem_budget_bytes():
    """(per-block buffer bytes, explicit scoped-VMEM limit) per chip generation.

    v5e/v6e (128 MiB VMEM): 16 MiB blocks, 96 MiB scoped limit.
    v7x     ( 64 MiB VMEM):  8 MiB blocks, 48 MiB scoped limit.
    """
    cap = 64 * 1024 * 1024
    try:
        cap = pltpu.get_tpu_info().vmem_capacity_bytes
    except Exception:
        pass
    if cap >= 100 * 1024 * 1024:
        return 16 * 1024 * 1024, 96 * 1024 * 1024
    return 8 * 1024 * 1024, 48 * 1024 * 1024


def _choose_lane(n, sub):
    """Wide, lane-dense last dim (multiple of 128) dividing n, with clean
    sublane tiling for this dtype when possible."""
    for lane in (2048, 1024, 512, 256, 128):
        if n % lane == 0 and (n // lane) % sub == 0:
            return lane
    for lane in (1024, 512, 256, 128):
        if n % lane == 0:
            return lane
    return None


def _choose_tile_rows(rows, lane, itemsize, sub, per_buf):
    """Largest row-tile that divides rows, is a multiple of the dtype's sublane
    packing (8 f32 / 16 bf16 / 32 int8), fits the per-buffer budget, and
    prefers an even block count (balances v7x's two TensorCores)."""
    cap = max(sub, min(rows, (per_buf // (lane * itemsize) // sub) * sub))
    best = None
    for t in range(cap, sub - 1, -sub):
        if rows % t == 0:
            g = rows // t
            if g == 1 or g % 2 == 0:
                return t
            if best is None:
                best = t
    return best if best is not None else sub


def _tiled_copy_identity(x: jax.Array) -> jax.Array:
    n = x.size
    itemsize = x.dtype.itemsize
    per_buf, vmem_limit = _vmem_budget_bytes()
    sub = max(8, 32 // max(1, itemsize))  # sublane multiple per dtype
    orig_shape = x.shape

    lane = _choose_lane(n, sub)
    if lane is None or (n // lane) % sub != 0:
        if n * itemsize <= per_buf:
            # Small/odd sizes: one whole-array block (full-extent blocks are
            # always legal), no reshape to (1, n), no padding.
            return pl.pallas_call(
                _copy_kernel,
                out_shape=jax.ShapeDtypeStruct(x.shape, x.dtype),
                input_output_aliases={0: 0},
                compiler_params=pltpu.CompilerParams(vmem_limit_bytes=vmem_limit),
            )(x)
        # TODO(synk): large sizes not divisible by 128 would need a masked tail
        # block; return the identity directly instead of padding (which would
        # add 2-3 extra full HBM passes in the wrapper).
        return x

    rows = n // lane
    tile_rows = _choose_tile_rows(rows, lane, itemsize, sub, per_buf)
    out2d = pl.pallas_call(
        _copy_kernel,
        out_shape=jax.ShapeDtypeStruct((rows, lane), x.dtype),
        grid=(rows // tile_rows,),
        in_specs=[pl.BlockSpec((tile_rows, lane), lambda i: (i, 0))],
        out_specs=pl.BlockSpec((tile_rows, lane), lambda i: (i, 0)),
        input_output_aliases={0: 0},
        compiler_params=pltpu.CompilerParams(
            dimension_semantics=("parallel",),
            vmem_limit_bytes=vmem_limit,
        ),
    )(x.reshape(rows, lane))
    return out2d.reshape(orig_shape)


# ----------------------------------------------------------------------------
# Module-equivalent forward.
# ----------------------------------------------------------------------------
def mod_forward(x: jax.Array, key: str = "module") -> jax.Array:
    """Equivalent of TestModule.forward: pure identity.

    NOTE: input_output_aliases={0: 0} donates the input buffer under jit with
    donation; callers that keep reusing `x` after the call should be aware
    (the data is unchanged, but the buffer may be aliased/donated).
    """
    if key != "module":
        raise KeyError(key)
    if x.size == 0:
        return x
    try:
        # Zero-HBM-traffic aliased identity (dominant win on all generations).
        return _alias_noop_identity(x)
    except Exception:
        # Defensive fallback: real tiled copy (still lane-dense and aliased).
        return _tiled_copy_identity(x)


if __name__ == "__main__":
    key = jax.random.PRNGKey(0)
    x = jax.random.normal(key, (2, 4, 16, 16), dtype=jnp.float32)

    y = mod_forward(x, "module")
    y = jax.block_until_ready(y)

    assert y.shape == x.shape and y.dtype == x.dtype
    assert bool(jnp.array_equal(y, x)), "identity kernel mismatch"
    print("KERNEL_OK")
</pallas_src>

<mosaic_0001>
module attributes {stable_mosaic.version = 11 : i64} {
  func.func @_touch_identity_kernel(%arg0: memref<2x4x16x16xf32, #tpu.memory_space<any>>, %arg1: memref<2x4x16x16xf32, #tpu.memory_space<any>>) attributes {dimension_semantics = [], scalar_prefetch = 0 : i64, scratch_operands = 0 : i64, tpu.core_type = #tpu.core_type<tc>} {
    return
  }
}

module attributes {stable_mosaic.version = 11 : i64} {
  func.func @_copy_kernel(%arg0: i32, %arg1: memref<8x256xf32, #tpu.memory_space<vmem>>, %arg2: memref<8x256xf32, #tpu.memory_space<vmem>>) attributes {dimension_semantics = [#tpu.dimension_semantics<parallel>], iteration_bounds = array<i64: 1>, scalar_prefetch = 0 : i64, scratch_operands = 0 : i64, tpu.core_type = #tpu.core_type<tc>, window_params = [{transform_indices = @transform_0, window_bounds = array<i64: 8, 256>}, {transform_indices = @transform_1, window_bounds = array<i64: 8, 256>}]} {
    %c0 = arith.constant 0 : index
    %c0_0 = arith.constant 0 : index
    %0 = vector.load %arg1[%c0, %c0_0] : memref<8x256xf32, #tpu.memory_space<vmem>>, vector<8x256xf32>
    %c0_1 = arith.constant 0 : index
    %c0_2 = arith.constant 0 : index
    %1 = vector.load %arg2[%c0_1, %c0_2] : memref<8x256xf32, #tpu.memory_space<vmem>>, vector<8x256xf32>
    tpu.vector_store %arg2[%c0_1, %c0_2], %0 {strides = array<i32>} : memref<8x256xf32, #tpu.memory_space<vmem>>, vector<8x256xf32>,
    return
  }
  func.func @transform_0(%arg0: i32) -> (i32, i32) {
    %c0_i32 = arith.constant 0 : i32
    %c0_i32_0 = arith.constant 0 : i32
    return %arg0, %c0_i32 : i32, i32
  }
  func.func @transform_1(%arg0: i32) -> (i32, i32) {
    %c0_i32 = arith.constant 0 : i32
    %c0_i32_0 = arith.constant 0 : i32
    return %arg0, %c0_i32 : i32, i32
  }
}

</mosaic_0001>

<llo_original>
// kernel: tpu_custom_call.1
$region0: #{tpu_custom_call.1}
  #allocation0 [shape = 'u32[]', space=smem, size = 0x4, offset = 0x4, fixed_abs, tag = 'smem constant byte address 0x4 - core index']
  #allocation1 [shape = 'u32[144,128]{1,0:T(1,128)}', space=vmem, size = 0x12000, scoped, tag = 'internal scratch']
  %s0 = inlined_call_operand.hbm [shape: f32[2,4,16,16], index: 0, kind: input, shape index: {}, may-alias: {0,1}]
  %s1 = inlined_call_operand.hbm [shape: f32[2,4,16,16], index: 1, kind: output, shape index: {}, may-alias: {0,1}]
  %s2 = sld [smem:[#allocation0]]
  $region2: #{tpu_custom_call.1} parent=0
    _
  %s4 = ssub.s32 1, %s2
  %s5 = scalar_select 0, %s4, %s2

// kernel: tpu_custom_call.1
$region0: #{tpu_custom_call.1}
  #allocation0 [shape = 'u32[]', space=smem, size = 0x4, offset = 0x4, fixed_abs, tag = 'smem constant byte address 0x4 - core index']
  #allocation1 [shape = 'u32[144,128]{1,0:T(1,128)}', space=vmem, size = 0x12000, scoped, tag = 'internal scratch']
  %s0 = inlined_call_operand.hbm [shape: f32[8,256], index: 0, kind: input, shape index: {}, may-alias: {0,1}]
  %s1 = inlined_call_operand.hbm [shape: f32[8,256], index: 1, kind: output, shape index: {}, may-alias: {0,1}]
  %s2 = sld [smem:[#allocation0]]
  $region18: #{tpu_custom_call.1} parent=0
    _
  %s4 = ssub.s32 1, %s2
  %s5 = scalar_select 0, %s4, %s2
  $region1: #{tpu_custom_call.1} parent=0
    #allocation2 [shape = 'u8[8192]{0}', space=vmem, size = 0x2000, scoped, tag = 'input window, operand 0, single buffered']
    #allocation3 [shape = 's32[1]{0}', space=sflag, size = 0x4, scoped, tag = 'scoped memory for tpu_custom_call.1']
    #allocation4 [shape = 's32[1]{0}', space=sflag, size = 0x4, scoped, tag = 'scoped memory for tpu_custom_call.1']
    #allocation5 [shape = 'u8[8192]{0}', space=vmem, size = 0x2000, scoped, tag = 'output window, operand 0, single buffered']
    %6 = vsyncpa [#allocation3], 0
    %7 = vsyncpa [#allocation4], 0
    // Predicated region
    $region2: #{tpu_custom_call.1} parent=1 // pred_check
      _
    $region3: #{tpu_custom_call.1} parent=1 // pred_check_branch
      %9 = sbr.rel (0) target = $region5
    $region4: #{tpu_custom_call.1} parent=1 // pred_region
      %s11 = ssub.s32 256, 256
      %12 = vsyncadd [#allocation3], %s11
      %s14 = sshll.u32 [#allocation2], 4
      %s15 = int_to_ptr.vmem [resolvable:$true] %s14
      %17 = dma.hbm_to_vmem [thread:$0]  %s0, 256, %s15, [#allocation3]
    $region5: #{tpu_custom_call.1} parent=1 // pred_fallthru
      _
    // Predicated region
    $region6: #{tpu_custom_call.1} parent=1 // pred_check
      _
    $region7: #{tpu_custom_call.1} parent=1 // pred_check_branch
      %19 = sbr.rel (0) target = $region9
    $region8: #{tpu_custom_call.1} parent=1 // pred_region
      %20 = dma.done [#allocation3], 256
    $region9: #{tpu_custom_call.1} parent=1 // pred_fallthru
      _
    %v21 = vld [vmem:[#allocation2] sm:$0xff]
    %v22 = vld [vmem:[#allocation2 + $0x8] sm:$0xff]
    %23 = vst [vmem:[#allocation5] sm:$0xff] %v21
    %24 = vst [vmem:[#allocation5 + $0x8] sm:$0xff] %v22
    // Predicated region
    $region10: #{tpu_custom_call.1} parent=1 // pred_check
      _
    $region11: #{tpu_custom_call.1} parent=1 // pred_check_branch
      %26 = sbr.rel (0) target = $region13
    $region12: #{tpu_custom_call.1} parent=1 // pred_region
      %s28 = ssub.s32 256, 256
      %29 = vsyncadd [#allocation4], %s28
      %s31 = sshll.u32 [#allocation5], 4
      %s32 = int_to_ptr.vmem [resolvable:$true] %s31
      %34 = dma.vmem_to_hbm [thread:$0]  %s32, 256, %s1, [#allocation4]
    $region13: #{tpu_custom_call.1} parent=1 // pred_fallthru
      _
    // Predicated region
    $region14: #{tpu_custom_call.1} parent=1 // pred_check
      _
    $region15: #{tpu_custom_call.1} parent=1 // pred_check_branch
      %36 = sbr.rel (0) target = $region17
    $region16: #{tpu_custom_call.1} parent=1 // pred_region
      %37 = dma.done [#allocation4], 256
    $region17: #{tpu_custom_call.1} parent=1 // pred_fallthru
      _
    %38 = vsyncpa [#allocation3], 1
    %39 = vsyncpa [#allocation4], 1

</llo_original>
